<compile_context>
chip_gen: v5e
topology: v5e:2x2
jax: 0.10.0
libtpu: 0.0.40
codegen_flags: <defaults>
</compile_context>

<pallas_src>
import functools
import math

import jax
import jax.numpy as jnp
from jax import lax
from jax.experimental import pallas as pl
from jax.experimental.pallas import tpu as pltpu


def _avg_readout_kernel(x_ref, o_ref, *scratch, tile_s, acc_rows, valid_rows,
                        inv_denom, num_s_per_part, any_ragged):
    """grid = (num_sp, num_d, num_s_per_part); reduction over the last axis.

    x_ref  : (tile_s, tile_d)      input tile (VMEM)
    o_ref  : (1, 1, tile_d) f32    per-partition partial mean, resident over S
    scratch: optional (acc_rows, tile_d) f32 accumulator (absent when num_s==1)
    """
    p = pl.program_id(0)   # S-partition (parallel)
    si = pl.program_id(2)  # reduction step (arbitrary)
    direct = (num_s_per_part == 1)  # compile-time specialization

    x = x_ref[...].astype(jnp.float32)

    def fold(v):
        if direct:
            return jnp.sum(v, axis=0, keepdims=True)             # (1, tile_d)
        # Fold tile rows onto the accumulator's sublanes: steady state is
        # pure lane-parallel VPU adds (no cross-sublane XLU work per step).
        return jnp.sum(v.reshape(tile_s // acc_rows, acc_rows, v.shape[-1]),
                       axis=0)                                    # (acc_rows, tile_d)

    def masked(v):
        t = p * num_s_per_part + si
        rid = t * tile_s + lax.broadcasted_iota(jnp.int32, (tile_s, 1), 0)
        return jnp.where(rid < valid_rows, v, 0.0)

    if direct:
        # Single reduction step: skip scratch, init and finalize entirely.
        xs = masked(x) if any_ragged else x
        o_ref[...] = (fold(xs) * inv_denom)[None].astype(o_ref.dtype)
        return

    acc_ref = scratch[0]

    @pl.when(si == 0)
    def _init():
        acc_ref[...] = jnp.zeros_like(acc_ref)

    if any_ragged:
        # Mask only on steps whose tile extends past the valid rows (the
        # ragged last real tile and any fully out-of-range partition tile).
        t = p * num_s_per_part + si
        is_ragged = (t + 1) * tile_s > valid_rows

        @pl.when(is_ragged)
        def _ragged_add():
            acc_ref[...] += fold(masked(x))

        @pl.when(jnp.logical_not(is_ragged))
        def _plain_add():
            acc_ref[...] += fold(x)
    else:
        acc_ref[...] += fold(x)

    @pl.when(si == num_s_per_part - 1)
    def _finalize():
        total = jnp.sum(acc_ref[...], axis=0, keepdims=True)  # one 8->1 reduce
        o_ref[...] = (total * inv_denom)[None].astype(o_ref.dtype)


def _default_target_tile_bytes():
    # ~4 MiB is safe on every generation; bump to ~8 MiB only where physical
    # VMEM is 128 MiB (v5e/v6e) — we raise vmem_limit_bytes explicitly below.
    try:
        info = pltpu.get_tpu_info()
        vmem = getattr(info, "vmem_capacity_bytes", None)
        if vmem is not None and int(vmem) >= 96 * 1024 * 1024:
            return 8 * 1024 * 1024
    except Exception:
        pass
    return 4 * 1024 * 1024


def avg_readout(seq, target_tile_bytes=None):
    """Pallas equivalent of `torch.mean(seq, 0)` (reduce over axis 0)."""
    orig_trailing_shape = seq.shape[1:]
    S = seq.shape[0]
    D = int(math.prod(orig_trailing_shape)) if orig_trailing_shape else 1
    itemsize = jnp.dtype(seq.dtype).itemsize

    if target_tile_bytes is None:
        target_tile_bytes = _default_target_tile_bytes()

    # --- lane packing: make the lane (last) dim a multiple of 128 when cheap ---
    k = 1
    if D % 128 != 0:
        k_cand = 128 // math.gcd(D, 128)
        if k_cand > 1 and S % k_cand == 0:
            k = k_cand
    S_eff = S // k
    D_eff = D * k
    x2d = seq.reshape(S_eff, D_eff)  # pure row-major reinterpretation

    # --- tile_d: 128-multiple divisor of D_eff, capped, with a 512-lane floor ---
    LANE_CAP = 2048
    MIN_TILE_D = 512
    tile_d = D_eff
    if D_eff % 128 == 0 and D_eff > LANE_CAP:
        units = D_eff // 128
        best = 1
        t = 1
        while t * 128 <= LANE_CAP and t <= units:
            if units % t == 0:
                best = t
            t += 1
        cand = best * 128
        if cand >= MIN_TILE_D:   # avoid 128-lane strided-row DMAs
            tile_d = cand

    # --- tile_s: ~target_tile_bytes per tile, multiple of the sublane pack ---
    min_sub = {4: 8, 2: 16, 1: 32}.get(itemsize, 8)
    rows = max(min_sub, target_tile_bytes // (tile_d * itemsize))
    rows = (rows // min_sub) * min_sub
    tile_s = S_eff if rows >= S_eff else rows

    num_d = D_eff // tile_d
    num_s_total = pl.cdiv(S_eff, tile_s)

    # --- v7x dual-TC: if D isn't tiled, split S into 2 parallel partitions ---
    num_sp = 2 if (num_d == 1 and num_s_total >= 2) else 1
    num_s_per_part = pl.cdiv(num_s_total, num_sp)
    any_ragged = (num_sp * num_s_per_part * tile_s) > S_eff

    direct = (num_s_per_part == 1)
    acc_rows = 8 if tile_s % 8 == 0 else tile_s

    if num_sp * num_s_per_part > num_s_total:
        # Last partition has an out-of-range step: clamp the block index (the
        # in-kernel mask zeroes its contribution regardless of what's loaded).
        def in_index_map(p, j, i):
            return (jnp.minimum(p * num_s_per_part + i, num_s_total - 1), j)
    else:
        def in_index_map(p, j, i):
            return (p * num_s_per_part + i, j)

    kernel = functools.partial(
        _avg_readout_kernel,
        tile_s=tile_s,
        acc_rows=acc_rows,
        valid_rows=S_eff,
        inv_denom=1.0 / S,  # scale by original row count (exact with k-fold)
        num_s_per_part=num_s_per_part,
        any_ragged=any_ragged,
    )

    scratch_shapes = [] if direct else [pltpu.VMEM((acc_rows, tile_d), jnp.float32)]

    # Explicit scoped-VMEM budget: double-buffered input + scratch + output.
    in_buf = 2 * tile_s * tile_d * itemsize
    sc_buf = 0 if direct else acc_rows * tile_d * 4
    out_buf = 2 * tile_d * 4
    vmem_limit = int(min(64 * 1024 * 1024,
                         max(32 * 1024 * 1024, 2 * (in_buf + sc_buf + out_buf))))

    cost = pl.CostEstimate(
        flops=S_eff * D_eff,           # one add per input element
        transcendentals=0,
        bytes_accessed=S_eff * D_eff * itemsize + num_sp * D_eff * 4,
    )

    out3d = pl.pallas_call(
        kernel,
        out_shape=jax.ShapeDtypeStruct((num_sp, 1, D_eff), jnp.float32),
        grid_spec=pltpu.PrefetchScalarGridSpec(
            num_scalar_prefetch=0,
            # S-partition & D axes leading + parallel (megacore sharding on
            # v7x); reduction (S) axis last + arbitrary -> resident accumulator.
            grid=(num_sp, num_d, num_s_per_part),
            in_specs=[pl.BlockSpec((tile_s, tile_d), in_index_map)],
            out_specs=pl.BlockSpec((1, 1, tile_d), lambda p, j, i: (p, 0, j)),
            scratch_shapes=scratch_shapes,
        ),
        compiler_params=pltpu.CompilerParams(
            dimension_semantics=("parallel", "parallel", "arbitrary"),
            vmem_limit_bytes=vmem_limit,
        ),
        cost_estimate=cost,
    )(x2d)

    # Combine partition + lane-fold partial sums in f32, cast exactly once.
    partials = out3d.reshape(num_sp * k, D)
    if num_sp * k > 1:
        out = jnp.sum(partials, axis=0)
    else:
        out = partials.reshape(D)
    return out.astype(seq.dtype).reshape(orig_trailing_shape)


if __name__ == "__main__":
    key = jax.random.PRNGKey(0)

    # Case 1: seq (seq_len=8, batch=2, hidden=32) -> mean over dim 0 -> (2, 32).
    # Exercises the direct (num_s == 1) specialization + lane folding.
    seq = jax.random.normal(key, (8, 2, 32), dtype=jnp.float32)
    out = jax.block_until_ready(avg_readout(seq))
    ref = jnp.mean(seq, axis=0)
    assert out.shape == ref.shape, (out.shape, ref.shape)
    assert jnp.allclose(out, ref, atol=1e-5, rtol=1e-5), "mismatch (case 1)"

    # Case 2: ragged last tile + 2-way S partition, direct mode.
    seq2 = jax.random.normal(jax.random.PRNGKey(1), (40, 2, 32), dtype=jnp.float32)
    out2 = jax.block_until_ready(avg_readout(seq2, target_tile_bytes=8 * 1024))
    ref2 = jnp.mean(seq2, axis=0)
    assert out2.shape == ref2.shape, (out2.shape, ref2.shape)
    assert jnp.allclose(out2, ref2, atol=1e-5, rtol=1e-5), "mismatch (case 2)"

    # Case 3: multi-step accumulate mode (resident scratch), even partition split.
    seq3 = jax.random.normal(jax.random.PRNGKey(2), (256, 2, 32), dtype=jnp.float32)
    out3 = jax.block_until_ready(avg_readout(seq3, target_tile_bytes=8 * 1024))
    ref3 = jnp.mean(seq3, axis=0)
    assert jnp.allclose(out3, ref3, atol=1e-5, rtol=1e-5), "mismatch (case 3)"

    # Case 4: odd number of S tiles -> one fully out-of-range partition step
    # (clamped index map + gated mask) in accumulate mode.
    seq4 = jax.random.normal(jax.random.PRNGKey(3), (160, 2, 32), dtype=jnp.float32)
    out4 = jax.block_until_ready(avg_readout(seq4, target_tile_bytes=8 * 1024))
    ref4 = jnp.mean(seq4, axis=0)
    assert jnp.allclose(out4, ref4, atol=1e-5, rtol=1e-5), "mismatch (case 4)"

    # Case 5: bf16 input, non-128 feature dim (no folding) -> f32 accumulation,
    # single cast at the end.
    seq5 = jax.random.normal(jax.random.PRNGKey(4), (50, 3, 20), dtype=jnp.bfloat16)
    out5 = jax.block_until_ready(avg_readout(seq5))
    ref5 = jnp.mean(seq5.astype(jnp.float32), axis=0)
    assert out5.shape == ref5.shape, (out5.shape, ref5.shape)
    assert jnp.allclose(out5.astype(jnp.float32), ref5, atol=1e-2, rtol=1e-2), \
        "mismatch (case 5)"

    print("KERNEL_OK")
</pallas_src>

<mosaic_0001>
module attributes {stable_mosaic.version = 11 : i64} {
  func.func @_avg_readout_kernel(%arg0: i32, %arg1: i32, %arg2: i32, %arg3: memref<4x128xf32, #tpu.memory_space<vmem>>, %arg4: memref<1x1x128xf32, #tpu.memory_space<vmem>>) attributes {dimension_semantics = [#tpu.dimension_semantics<parallel>, #tpu.dimension_semantics<parallel>, #tpu.dimension_semantics<arbitrary>], iteration_bounds = array<i64: 1, 1, 1>, scalar_prefetch = 0 : i64, scratch_operands = 0 : i64, tpu.core_type = #tpu.core_type<tc>, window_params = [{transform_indices = @transform_0, window_bounds = array<i64: 4, 128>}, {transform_indices = @transform_1, window_bounds = array<i64: 1, 1, 128>}]} {
    %c0 = arith.constant 0 : index
    %c0_0 = arith.constant 0 : index
    %0 = vector.load %arg3[%c0, %c0_0] : memref<4x128xf32, #tpu.memory_space<vmem>>, vector<4x128xf32>
    %cst = arith.constant dense<0.000000e+00> : vector<128xf32>
    %1 = vector.multi_reduction <add>, %0, %cst [0] : vector<4x128xf32> to vector<128xf32>
    %2 = vector.shape_cast %1 : vector<128xf32> to vector<1x128xf32>
    %cst_1 = arith.constant 1.250000e-01 : f32
    %3 = vector.broadcast %cst_1 : f32 to vector<1x128xf32>
    %4 = arith.mulf %2, %3 : vector<1x128xf32>
    %5 = vector.shape_cast %4 : vector<1x128xf32> to vector<1x1x128xf32>
    %c0_2 = arith.constant 0 : index
    %c0_3 = arith.constant 0 : index
    %c0_4 = arith.constant 0 : index
    %6 = vector.load %arg4[%c0_2, %c0_3, %c0_4] : memref<1x1x128xf32, #tpu.memory_space<vmem>>, vector<1x1x128xf32>
    tpu.vector_store %arg4[%c0_2, %c0_3, %c0_4], %5 {strides = array<i32>} : memref<1x1x128xf32, #tpu.memory_space<vmem>>, vector<1x1x128xf32>,
    return
  }
  func.func @transform_0(%arg0: i32, %arg1: i32, %arg2: i32) -> (i32, i32) {
    %c1_i32 = arith.constant 1 : i32
    %0 = arith.muli %arg0, %c1_i32 : i32
    %1 = arith.addi %0, %arg2 : i32
    %c0_i32 = arith.constant 0 : i32
    return %1, %arg1 : i32, i32
  }
  func.func @transform_1(%arg0: i32, %arg1: i32, %arg2: i32) -> (i32, i32, i32) {
    %c0_i32 = arith.constant 0 : i32
    %c0_i32_0 = arith.constant 0 : i32
    return %arg0, %c0_i32, %arg1 : i32, i32, i32
  }
}

</mosaic_0001>

<llo_original>
// kernel: tpu_custom_call.1
$region0: #{tpu_custom_call.1}
  #allocation0 [shape = 'u32[]', space=smem, size = 0x4, offset = 0x4, fixed_abs, tag = 'smem constant byte address 0x4 - core index']
  #allocation1 [shape = 'u32[72,128]{1,0:T(1,128)}', space=vmem, size = 0x9000, scoped, tag = 'internal scratch']
  %s0 = inlined_call_operand.hbm [shape: f32[4,128], index: 0, kind: input, shape index: {}]
  %s1 = inlined_call_operand.hbm [shape: f32[1,1,128], index: 1, kind: output, shape index: {}]
  %s2 = sld [smem:[#allocation0]]
  $region18: #{tpu_custom_call.1} parent=0
    _
  %s4 = ssub.s32 1, %s2
  %s5 = scalar_select 0, %s4, %s2
  $region1: #{tpu_custom_call.1} parent=0
    #allocation2 [shape = 'u8[2048]{0}', space=vmem, size = 0x800, scoped, tag = 'input window, operand 0, single buffered']
    #allocation3 [shape = 's32[1]{0}', space=sflag, size = 0x4, scoped, tag = 'scoped memory for tpu_custom_call.1']
    #allocation4 [shape = 's32[1]{0}', space=sflag, size = 0x4, scoped, tag = 'scoped memory for tpu_custom_call.1']
    #allocation5 [shape = 'u8[512]{0}', space=vmem, size = 0x400, scoped, tag = 'output window, operand 0, single buffered']
    %6 = vsyncpa [#allocation3], 0
    %7 = vsyncpa [#allocation4], 0
    // Predicated region
    $region2: #{tpu_custom_call.1} parent=1 // pred_check
      _
    $region3: #{tpu_custom_call.1} parent=1 // pred_check_branch
      %9 = sbr.rel (0) target = $region5
    $region4: #{tpu_custom_call.1} parent=1 // pred_region
      %s10 = sadd.s32 0, 0
      %12 = vsyncadd [#allocation3], 0
      %s13 = smul.addr %s10, 4
      %s14 = scalar_lea.hbm %s0, %s13
      %s16 = sshll.u32 %s14, 4
      %s17 = int_to_ptr.hbm [resolvable:$true] %s16
      %s18 = sshll.u32 [#allocation2], 4
      %s19 = int_to_ptr.vmem [resolvable:$true] %s18
      %21 = dma.hbm_to_vmem [thread:$0]  %s17, 64, %s19, [#allocation3]
    $region5: #{tpu_custom_call.1} parent=1 // pred_fallthru
      _
    // Predicated region
    $region6: #{tpu_custom_call.1} parent=1 // pred_check
      _
    $region7: #{tpu_custom_call.1} parent=1 // pred_check_branch
      %23 = sbr.rel (0) target = $region9
    $region8: #{tpu_custom_call.1} parent=1 // pred_region
      %25 = dma.done [#allocation3], 64
    $region9: #{tpu_custom_call.1} parent=1 // pred_fallthru
      _
    %s26 = sadd.s32 0, 0
    %v27 = vld [vmem:[#allocation2] sm:$0xf]
    %vm28 = vcmask 1043456
    %v29 = vsel %vm28, %v27, 0.0
    %v30 = vrot.slane %v29, 4
    %v31 = vadd.f32 %v29, %v30
    %v32 = vrot.slane %v31, 2
    %v33 = vadd.f32 %v31, %v32
    %v34 = vrot.slane %v33, 1
    %v35 = vadd.f32 %v33, %v34
    %v36 = vmul.f32 %v35, 0.125
    %37 = vst [vmem:[#allocation5] sm:$0x1] %v36
    // Predicated region
    $region10: #{tpu_custom_call.1} parent=1 // pred_check
      _
    $region11: #{tpu_custom_call.1} parent=1 // pred_check_branch
      %39 = sbr.rel (0) target = $region13
    $region12: #{tpu_custom_call.1} parent=1 // pred_region
      %41 = vsyncadd [#allocation4], 0
      %s43 = sshll.u32 [#allocation5], 4
      %s44 = int_to_ptr.vmem [resolvable:$true] %s43
      %s45 = sshll.u32 %s1, 4
      %s46 = int_to_ptr.hbm [resolvable:$true] %s45
      %48 = dma.vmem_to_hbm [thread:$0]  %s44, 16, %s46, [#allocation4]
    $region13: #{tpu_custom_call.1} parent=1 // pred_fallthru
      _
    // Predicated region
    $region14: #{tpu_custom_call.1} parent=1 // pred_check
      _
    $region15: #{tpu_custom_call.1} parent=1 // pred_check_branch
      %50 = sbr.rel (0) target = $region17
    $region16: #{tpu_custom_call.1} parent=1 // pred_region
      %52 = dma.done [#allocation4], 16
    $region17: #{tpu_custom_call.1} parent=1 // pred_fallthru
      _
    %53 = vsyncpa [#allocation3], 1
    %54 = vsyncpa [#allocation4], 1

</llo_original>
